<compile_context>
chip_gen: v7x
topology: tpu7x:2x2x1
jax: 0.10.0
libtpu: 0.0.40
codegen_flags: <defaults>
</compile_context>

<pallas_src>
import functools

import jax
import jax.numpy as jnp
import numpy as np
from jax.experimental import pallas as pl
from jax.experimental.pallas import tpu as pltpu

EPS = 1e-6


def _round_up(x, m):
    return ((x + m - 1) // m) * m


def _epe_kernel(flow_ref, gt_ref, mask_ref, o_ref, *, n_ch):
    # flow_ref, gt_ref : (1, C, TH, W)    mask_ref, o_ref : (1, 1, TH, W)
    # Running f32 accumulator over channels: C VPU mul+adds per element, one
    # EUP sqrt per vreg, no XLU/MXU.  Peak temporaries ~ 2 * TH * W * 4 bytes.
    d = (flow_ref[0, 0] - gt_ref[0, 0]).astype(jnp.float32)
    ssq = d * d
    for c in range(1, n_ch):
        d = (flow_ref[0, c] - gt_ref[0, c]).astype(jnp.float32)
        ssq = ssq + d * d
    epe = jnp.sqrt(ssq + EPS)
    o_ref[0, 0] = (epe * mask_ref[0, 0].astype(jnp.float32)).astype(o_ref.dtype)


def epe_forward(flow, gt, loss_mask):
    """flow, gt: (N, C, H, W); loss_mask: (N, 1, H, W). Returns (N, 1, H, W)."""
    N, C, H, W = flow.shape
    assert gt.shape == (N, C, H, W)
    assert loss_mask.shape == (N, 1, H, W)

    # Match torch's gt.detach() under differentiation.
    gt = jax.lax.stop_gradient(gt)

    itemsize = jnp.dtype(flow.dtype).itemsize
    # Minimum sublane multiple per dtype: f32 -> 8, bf16 -> 16, int8/fp8 -> 32.
    sublane = max(8, 32 // max(itemsize, 1))

    # ---- chip-aware per-step VMEM budget ----------------------------------
    try:
        info = pltpu.get_tpu_info()
        vmem_cap = int(getattr(info, "vmem_capacity_bytes", 64 << 20))
    except Exception:  # pragma: no cover - e.g. interpret mode / CPU trace
        vmem_cap = 64 << 20  # conservative: v7x per-TC VMEM
    # Live blocks per grid step (double-buffered by Pallas), leave headroom.
    step_budget = max(8 << 20, min(24 << 20, vmem_cap // 3))

    # ---- row-tile height ---------------------------------------------------
    row_bytes = (2 * C + 2) * W * itemsize  # flow + gt + mask + out, one row
    th_cap = max(sublane,
                 (step_budget // max(row_bytes, 1)) // sublane * sublane)
    TH = min(_round_up(H, sublane), th_cap, 1024)
    if TH >= H:
        TH = H  # full-extent block is always a legal block dim

    # Ensure enough (balanced) parallel grid steps for v7x's two TensorCores.
    while N * pl.cdiv(H, TH) < 4 and TH > sublane:
        TH = max(sublane, (max(TH // 2, 1) // sublane) * sublane)

    n_row_tiles = pl.cdiv(H, TH)

    blk_in = pl.BlockSpec((1, C, TH, W), lambda n, h: (n, 0, h, 0))
    blk_1c = pl.BlockSpec((1, 1, TH, W), lambda n, h: (n, 0, h, 0))

    # Explicit scoped-VMEM limit sized from the real footprint:
    #   2x double-buffered blocks + in-kernel f32 temporaries + slack.
    blk_bytes = (2 * C + 2) * TH * W * itemsize
    tmp_bytes = 3 * TH * W * 4
    vmem_limit = int(min(max(vmem_cap - (8 << 20), 16 << 20),
                         max(32 << 20, 2 * blk_bytes + tmp_bytes + (4 << 20))))

    cost = pl.CostEstimate(
        flops=3 * N * C * H * W + 2 * N * H * W,
        transcendentals=N * H * W,
        bytes_accessed=(2 * C + 2) * N * H * W * itemsize,
    )

    return pl.pallas_call(
        functools.partial(_epe_kernel, n_ch=C),
        out_shape=jax.ShapeDtypeStruct((N, 1, H, W), flow.dtype),
        grid=(N, n_row_tiles),
        in_specs=[blk_in, blk_in, blk_1c],
        out_specs=blk_1c,
        compiler_params=pltpu.CompilerParams(
            dimension_semantics=("parallel", "parallel"),
            vmem_limit_bytes=vmem_limit),
        cost_estimate=cost,
    )(flow, gt, loss_mask)


def _reference(flow, gt, loss_mask):
    loss_map = (flow - gt) ** 2
    loss_map = jnp.sqrt(jnp.sum(loss_map, axis=1, keepdims=True) + EPS)
    return loss_map * loss_mask


if __name__ == "__main__":
    key = jax.random.PRNGKey(0)
    kf, kg, km = jax.random.split(key, 3)
    N, C, H, W = 2, 4, 16, 16
    flow = jax.random.normal(kf, (N, C, H, W), dtype=jnp.float32)
    gt = jax.random.normal(kg, (N, C, H, W), dtype=jnp.float32)
    loss_mask = (jax.random.uniform(km, (N, 1, H, W)) > 0.3).astype(jnp.float32)

    out = jax.block_until_ready(epe_forward(flow, gt, loss_mask))
    ref = jax.block_until_ready(_reference(flow, gt, loss_mask))

    assert out.shape == (N, 1, H, W), out.shape
    np.testing.assert_allclose(np.asarray(out), np.asarray(ref),
                               rtol=1e-6, atol=1e-6)
    print("KERNEL_OK")
</pallas_src>

<mosaic_0001>
module attributes {stable_mosaic.version = 11 : i64} {
  func.func @_epe_kernel(%arg0: i32, %arg1: i32, %arg2: memref<1x4x8x16xf32, #tpu.memory_space<vmem>>, %arg3: memref<1x4x8x16xf32, #tpu.memory_space<vmem>>, %arg4: memref<1x1x8x16xf32, #tpu.memory_space<vmem>>, %arg5: memref<1x1x8x16xf32, #tpu.memory_space<vmem>>) attributes {dimension_semantics = [#tpu.dimension_semantics<parallel>, #tpu.dimension_semantics<parallel>], iteration_bounds = array<i64: 2, 2>, scalar_prefetch = 0 : i64, scratch_operands = 0 : i64, tpu.core_type = #tpu.core_type<tc>, window_params = [{transform_indices = @transform_0, window_bounds = array<i64: 1, 4, 8, 16>}, {transform_indices = @transform_1, window_bounds = array<i64: 1, 4, 8, 16>}, {transform_indices = @transform_2, window_bounds = array<i64: 1, 1, 8, 16>}, {transform_indices = @transform_3, window_bounds = array<i64: 1, 1, 8, 16>}]} {
    %c0 = arith.constant 0 : index
    %c0_0 = arith.constant 0 : index
    %c0_1 = arith.constant 0 : index
    %c0_2 = arith.constant 0 : index
    %0 = vector.load %arg2[%c0, %c0_0, %c0_1, %c0_2] : memref<1x4x8x16xf32, #tpu.memory_space<vmem>>, vector<1x1x8x16xf32>
    %1 = vector.shape_cast %0 : vector<1x1x8x16xf32> to vector<8x16xf32>
    %c0_3 = arith.constant 0 : index
    %c0_4 = arith.constant 0 : index
    %c0_5 = arith.constant 0 : index
    %c0_6 = arith.constant 0 : index
    %2 = vector.load %arg3[%c0_3, %c0_4, %c0_5, %c0_6] : memref<1x4x8x16xf32, #tpu.memory_space<vmem>>, vector<1x1x8x16xf32>
    %3 = vector.shape_cast %2 : vector<1x1x8x16xf32> to vector<8x16xf32>
    %4 = arith.subf %1, %3 : vector<8x16xf32>
    %5 = arith.mulf %4, %4 : vector<8x16xf32>
    %c0_7 = arith.constant 0 : index
    %c1 = arith.constant 1 : index
    %c0_8 = arith.constant 0 : index
    %c0_9 = arith.constant 0 : index
    %6 = vector.load %arg2[%c0_7, %c1, %c0_8, %c0_9] : memref<1x4x8x16xf32, #tpu.memory_space<vmem>>, vector<1x1x8x16xf32>
    %7 = vector.shape_cast %6 : vector<1x1x8x16xf32> to vector<8x16xf32>
    %c0_10 = arith.constant 0 : index
    %c1_11 = arith.constant 1 : index
    %c0_12 = arith.constant 0 : index
    %c0_13 = arith.constant 0 : index
    %8 = vector.load %arg3[%c0_10, %c1_11, %c0_12, %c0_13] : memref<1x4x8x16xf32, #tpu.memory_space<vmem>>, vector<1x1x8x16xf32>
    %9 = vector.shape_cast %8 : vector<1x1x8x16xf32> to vector<8x16xf32>
    %10 = arith.subf %7, %9 : vector<8x16xf32>
    %11 = arith.mulf %10, %10 : vector<8x16xf32>
    %12 = arith.addf %5, %11 : vector<8x16xf32>
    %c0_14 = arith.constant 0 : index
    %c2 = arith.constant 2 : index
    %c0_15 = arith.constant 0 : index
    %c0_16 = arith.constant 0 : index
    %13 = vector.load %arg2[%c0_14, %c2, %c0_15, %c0_16] : memref<1x4x8x16xf32, #tpu.memory_space<vmem>>, vector<1x1x8x16xf32>
    %14 = vector.shape_cast %13 : vector<1x1x8x16xf32> to vector<8x16xf32>
    %c0_17 = arith.constant 0 : index
    %c2_18 = arith.constant 2 : index
    %c0_19 = arith.constant 0 : index
    %c0_20 = arith.constant 0 : index
    %15 = vector.load %arg3[%c0_17, %c2_18, %c0_19, %c0_20] : memref<1x4x8x16xf32, #tpu.memory_space<vmem>>, vector<1x1x8x16xf32>
    %16 = vector.shape_cast %15 : vector<1x1x8x16xf32> to vector<8x16xf32>
    %17 = arith.subf %14, %16 : vector<8x16xf32>
    %18 = arith.mulf %17, %17 : vector<8x16xf32>
    %19 = arith.addf %12, %18 : vector<8x16xf32>
    %c0_21 = arith.constant 0 : index
    %c3 = arith.constant 3 : index
    %c0_22 = arith.constant 0 : index
    %c0_23 = arith.constant 0 : index
    %20 = vector.load %arg2[%c0_21, %c3, %c0_22, %c0_23] : memref<1x4x8x16xf32, #tpu.memory_space<vmem>>, vector<1x1x8x16xf32>
    %21 = vector.shape_cast %20 : vector<1x1x8x16xf32> to vector<8x16xf32>
    %c0_24 = arith.constant 0 : index
    %c3_25 = arith.constant 3 : index
    %c0_26 = arith.constant 0 : index
    %c0_27 = arith.constant 0 : index
    %22 = vector.load %arg3[%c0_24, %c3_25, %c0_26, %c0_27] : memref<1x4x8x16xf32, #tpu.memory_space<vmem>>, vector<1x1x8x16xf32>
    %23 = vector.shape_cast %22 : vector<1x1x8x16xf32> to vector<8x16xf32>
    %24 = arith.subf %21, %23 : vector<8x16xf32>
    %25 = arith.mulf %24, %24 : vector<8x16xf32>
    %26 = arith.addf %19, %25 : vector<8x16xf32>
    %cst = arith.constant 9.99999997E-7 : f32
    %27 = vector.broadcast %cst : f32 to vector<8x16xf32>
    %28 = arith.addf %26, %27 : vector<8x16xf32>
    %29 = math.sqrt %28 : vector<8x16xf32>
    %c0_28 = arith.constant 0 : index
    %c0_29 = arith.constant 0 : index
    %c0_30 = arith.constant 0 : index
    %c0_31 = arith.constant 0 : index
    %30 = vector.load %arg4[%c0_28, %c0_29, %c0_30, %c0_31] : memref<1x1x8x16xf32, #tpu.memory_space<vmem>>, vector<1x1x8x16xf32>
    %31 = vector.shape_cast %30 : vector<1x1x8x16xf32> to vector<8x16xf32>
    %32 = arith.mulf %29, %31 : vector<8x16xf32>
    %c0_32 = arith.constant 0 : index
    %c0_33 = arith.constant 0 : index
    %c0_34 = arith.constant 0 : index
    %c0_35 = arith.constant 0 : index
    %33 = vector.load %arg5[%c0_32, %c0_33, %c0_34, %c0_35] : memref<1x1x8x16xf32, #tpu.memory_space<vmem>>, vector<1x1x8x16xf32>
    %34 = vector.shape_cast %33 : vector<1x1x8x16xf32> to vector<8x16xf32>
    %35 = vector.shape_cast %32 : vector<8x16xf32> to vector<1x1x8x16xf32>
    tpu.vector_store %arg5[%c0_32, %c0_33, %c0_34, %c0_35], %35 {strides = array<i32>} : memref<1x1x8x16xf32, #tpu.memory_space<vmem>>, vector<1x1x8x16xf32>,
    return
  }
  func.func @transform_0(%arg0: i32, %arg1: i32) -> (i32, i32, i32, i32) {
    %c0_i32 = arith.constant 0 : i32
    %c0_i32_0 = arith.constant 0 : i32
    %c0_i32_1 = arith.constant 0 : i32
    return %arg0, %c0_i32, %arg1, %c0_i32_0 : i32, i32, i32, i32
  }
  func.func @transform_1(%arg0: i32, %arg1: i32) -> (i32, i32, i32, i32) {
    %c0_i32 = arith.constant 0 : i32
    %c0_i32_0 = arith.constant 0 : i32
    %c0_i32_1 = arith.constant 0 : i32
    return %arg0, %c0_i32, %arg1, %c0_i32_0 : i32, i32, i32, i32
  }
  func.func @transform_2(%arg0: i32, %arg1: i32) -> (i32, i32, i32, i32) {
    %c0_i32 = arith.constant 0 : i32
    %c0_i32_0 = arith.constant 0 : i32
    %c0_i32_1 = arith.constant 0 : i32
    return %arg0, %c0_i32, %arg1, %c0_i32_0 : i32, i32, i32, i32
  }
  func.func @transform_3(%arg0: i32, %arg1: i32) -> (i32, i32, i32, i32) {
    %c0_i32 = arith.constant 0 : i32
    %c0_i32_0 = arith.constant 0 : i32
    %c0_i32_1 = arith.constant 0 : i32
    return %arg0, %c0_i32, %arg1, %c0_i32_0 : i32, i32, i32, i32
  }
}

</mosaic_0001>

<llo_original>
// kernel: tpu_custom_call.1
$region0: #{tpu_custom_call.1}
  #allocation0 [shape = 'u32[]', space=smem, size = 0x4, offset = 0x4, fixed_abs, tag = 'smem constant byte address 0x4 - core index']
  #allocation1 [shape = 'u32[144,128]{1,0:T(1,128)}', space=vmem, size = 0x12000, scoped, tag = 'internal scratch']
  %s0 = inlined_call_operand.hbm [shape: f32[2,4,16,16], index: 0, kind: input, shape index: {}]
  %s1 = inlined_call_operand.hbm [shape: f32[2,4,16,16], index: 1, kind: input, shape index: {}]
  %s2 = inlined_call_operand.hbm [shape: f32[2,1,16,16], index: 2, kind: input, shape index: {}]
  %s3 = inlined_call_operand.hbm [shape: f32[2,1,16,16], index: 3, kind: output, shape index: {}]
  %s4 = sld [smem:[#allocation0]]
  $region57: #{tpu_custom_call.1} parent=0
    _
  %s6 = ssub.s32 1, %s4
  %s7 = scalar_select 0, %s6, %s4
  $region1: #{tpu_custom_call.1} parent=0
    #allocation2 [shape = 'u8[32768]{0}', space=vmem, size = 0x8000, scoped, tag = 'input window, operand 0']
    #allocation3 [shape = 's32[2]{0}', space=sflag, size = 0x8, scoped, tag = 'scoped memory for tpu_custom_call.1']
    #allocation4 [shape = 's32[2]{0}', space=sflag, size = 0x8, scoped, tag = 'scoped memory for tpu_custom_call.1']
    #allocation5 [shape = 'u8[32768]{0}', space=vmem, size = 0x8000, scoped, tag = 'input window, operand 1']
    #allocation6 [shape = 's32[2]{0}', space=sflag, size = 0x8, scoped, tag = 'scoped memory for tpu_custom_call.1']
    #allocation7 [shape = 'u8[8192]{0}', space=vmem, size = 0x2000, scoped, tag = 'input window, operand 2']
    #allocation8 [shape = 'u8[8192]{0}', space=vmem, size = 0x2000, scoped, tag = 'output window, operand 0']
    %8 = vsyncpa [#allocation3], 0
    %s9 = scalar_lea.sflag [#allocation3], 1
    %10 = vsyncpa %s9, 0
    %11 = vsyncpa [#allocation6], 0
    %s12 = scalar_lea.sflag [#allocation6], 1
    %13 = vsyncpa %s12, 0
    %14 = vsyncpa [#allocation4], 0
    %s15 = scalar_lea.sflag [#allocation4], 1
    %16 = vsyncpa %s15, 0
    loop: start=0, step=1, limit=6
    $region2: #{tpu_custom_call.1} parent=1 // loop_pre_header
      _
    $region3: #{tpu_custom_call.1} parent=1 // loop_header
      %s18 = sphi 0, %s22
      %p19 = scmp.ge.s32.totalorder %s18, 6
      %s25 = sphi 0, %s37
      %s26 = sphi 0, %s33
      %s27 = sphi 0, %s25
      %s28 = sphi 0, %s26
      %s29 = sphi 0, %s27
      %s30 = sphi 0, %s28
      %s42 = sphi 0, %s44
      %s45 = sphi 0, %s42
      %s46 = sphi 0, %s45
      %s62 = sphi 0, %s46
      %s70 = sphi 0, %s72
      %s73 = sphi 0, %s70
      %s74 = sphi 0, %s73
      %s90 = sphi 0, %s74
      %s98 = sphi 0, %s100
      %s101 = sphi 0, %s98
      %s102 = sphi 0, %s101
      %s118 = sphi 0, %s102
      %s126 = sphi 0, %s128
      %s129 = sphi 0, %s126
      %s130 = sphi 0, %s129
      %s146 = sphi 0, %s130
    $region4: #{tpu_custom_call.1} parent=1 // loop_header_branch
      %21 = sbr.rel (%p19) target = $region8
    $region5: #{tpu_custom_call.1} parent=1 // loop_body
      %s23 = ssub.s32 %s18, 1
      %s24 = ssub.s32 %s18, 2
      %s31 = sadd.s32 1, %s26
      %p32 = scmp.ge.s32.totalorder %s31, 2
      %s33 = scalar_select %p32, 0, %s31
      %s34 = sadd.s32 1, %s25
      %s35 = scalar_select %p32, %s34, %s25
      %p36 = scmp.ge.s32.totalorder %s35, 2
      %s37 = scalar_select %p36, 0, %s35
      %s38 = ssub.s32 %s25, %s37
      %s39 = ssub.s32 %s26, %s33
      %s40 = sor.u32 %s38, %s39
      %p41 = scmp.eq.s32.totalorder %s40, 0
      %s43 = sadd.s32 %s42, 1
      %s44 = scalar_select %p41, %s42, %s43
      %p47 = pneg %p41
      %p48 = scmp.eq.s32.totalorder %s18, 3
      %p49 = por %p47, %p48
      %p50 = scmp.ne.s32.totalorder %s42, %s45
      %p51 = scmp.eq.s32.totalorder %s18, 0
      %p52 = por %p50, %p51
      %p53 = scmp.ne.s32.totalorder %s42, %s45
      %p54 = scmp.eq.s32.totalorder %s23, 3
      %p55 = por %p53, %p54
      %p56 = scmp.ne.s32.totalorder %s45, %s46
      %p57 = scmp.eq.s32.totalorder %s23, 0
      %p58 = por %p56, %p57
      %p59 = scmp.ne.s32.totalorder %s45, %s46
      %p60 = scmp.eq.s32.totalorder %s24, 3
      %p61 = por %p59, %p60
      %p63 = scmp.ne.s32.totalorder %s46, %s62
      %p64 = scmp.eq.s32.totalorder %s24, 0
      %p65 = por %p63, %p64
      %s66 = ssub.s32 %s25, %s37
      %s67 = ssub.s32 %s26, %s33
      %s68 = sor.u32 %s66, %s67
      %p69 = scmp.eq.s32.totalorder %s68, 0
      %s71 = sadd.s32 %s70, 1
      %s72 = scalar_select %p69, %s70, %s71
      %p75 = pneg %p69
      %p76 = scmp.eq.s32.totalorder %s18, 3
      %p77 = por %p75, %p76
      %p78 = scmp.ne.s32.totalorder %s70, %s73
      %p79 = scmp.eq.s32.totalorder %s18, 0
      %p80 = por %p78, %p79
      %p81 = scmp.ne.s32.totalorder %s70, %s73
      %p82 = scmp.eq.s32.totalorder %s23, 3
      %p83 = por %p81, %p82
      %p84 = scmp.ne.s32.totalorder %s73, %s74
      %p85 = scmp.eq.s32.totalorder %s23, 0
      %p86 = por %p84, %p85
      %p87 = scmp.ne.s32.totalorder %s73, %s74
      %p88 = scmp.eq.s32.totalorder %s24, 3
      %p89 = por %p87, %p88
      %p91 = scmp.ne.s32.totalorder %s74, %s90
      %p92 = scmp.eq.s32.totalorder %s24, 0
      %p93 = por %p91, %p92
      %s94 = ssub.s32 %s25, %s37
      %s95 = ssub.s32 %s26, %s33
      %s96 = sor.u32 %s94, %s95
      %p97 = scmp.eq.s32.totalorder %s96, 0
      %s99 = sadd.s32 %s98, 1
      %s100 = scalar_select %p97, %s98, %s99
      %p103 = pneg %p97
      %p104 = scmp.eq.s32.totalorder %s18, 3
      %p105 = por %p103, %p104
      %p106 = scmp.ne.s32.totalorder %s98, %s101
      %p107 = scmp.eq.s32.totalorder %s18, 0
      %p108 = por %p106, %p107
      %p109 = scmp.ne.s32.totalorder %s98, %s101
      %p110 = scmp.eq.s32.totalorder %s23, 3
      %p111 = por %p109, %p110
      %p112 = scmp.ne.s32.totalorder %s101, %s102
      %p113 = scmp.eq.s32.totalorder %s23, 0
      %p114 = por %p112, %p113
      %p115 = scmp.ne.s32.totalorder %s101, %s102
      %p116 = scmp.eq.s32.totalorder %s24, 3
      %p117 = por %p115, %p116
      %p119 = scmp.ne.s32.totalorder %s102, %s118
      %p120 = scmp.eq.s32.totalorder %s24, 0
      %p121 = por %p119, %p120
      %s122 = ssub.s32 %s25, %s37
      %s123 = ssub.s32 %s26, %s33
      %s124 = sor.u32 %s122, %s123
      %p125 = scmp.eq.s32.totalorder %s124, 0
      %s127 = sadd.s32 %s126, 1
      %s128 = scalar_select %p125, %s126, %s127
      %p131 = pneg %p125
      %p132 = scmp.eq.s32.totalorder %s18, 3
      %p133 = por %p131, %p132
      %p134 = scmp.ne.s32.totalorder %s126, %s129
      %p135 = scmp.eq.s32.totalorder %s18, 0
      %p136 = por %p134, %p135
      %p137 = scmp.ne.s32.totalorder %s126, %s129
      %p138 = scmp.eq.s32.totalorder %s23, 3
      %p139 = por %p137, %p138
      %p140 = scmp.ne.s32.totalorder %s129, %s130
      %p141 = scmp.eq.s32.totalorder %s23, 0
      %p142 = por %p140, %p141
      %p143 = scmp.ne.s32.totalorder %s129, %s130
      %p144 = scmp.eq.s32.totalorder %s24, 3
      %p145 = por %p143, %p144
      %p147 = scmp.ne.s32.totalorder %s130, %s146
      %p148 = scmp.eq.s32.totalorder %s24, 0
      %p149 = por %p147, %p148
      %p150 = scmp.le.s32.totalorder 1, %s18
      %p151 = scmp.lt.s32.totalorder %s18, 5
      %p152 = pnand %p150, %p151
      %p153 = pneg %p152
      // Predicated region
      $region9: #{tpu_custom_call.1} parent=5 // pred_check
        _
      $region10: #{tpu_custom_call.1} parent=5 // pred_check_branch
        %155 = sbr.rel (%p152) target = $region12
      $region11: #{tpu_custom_call.1} parent=5 // pred_region
        %s156 = ssub.s32 %s18, 1
      $region12: #{tpu_custom_call.1} parent=5 // pred_fallthru
        _
      %p157 = scmp.lt.s32.totalorder %s18, 4
      // Predicated region
      $region13: #{tpu_custom_call.1} parent=5 // pred_check
        %p158 = pneg %p157
      $region14: #{tpu_custom_call.1} parent=5 // pred_check_branch
        %160 = sbr.rel (%p158) target = $region16
      $region15: #{tpu_custom_call.1} parent=5 // pred_region
        // Predicated region
        $region17: #{tpu_custom_call.1} parent=15 // pred_check
          %p161 = pneg %p52
        $region18: #{tpu_custom_call.1} parent=15 // pred_check_branch
          %163 = sbr.rel (%p161) target = $region20
        $region19: #{tpu_custom_call.1} parent=15 // pred_region
          %s164 = sand.u32 %s42, 1
          %s165 = scalar_lea.sflag [#allocation3], %s164
          %s166 = sand.u32 %s42, 1
          %s167 = smul.addr %s166, 32
          %s168 = scalar_lea.vmem [#allocation2], %s167
          %s170 = ssub.s32 512, 512
          %171 = vsyncadd %s165, %s170
          %s172 = smul.addr %s25, 8
          %s173 = sadd.s32 %s26, %s172
          %s174 = smul.addr %s173, 128
          %s175 = scalar_lea.hbm %s0, %s174
          %s176 = sshll.u32 %s168, 4
          %s177 = int_to_ptr.vmem [resolvable:$true] %s176
          %182 = dma.hbm_to_vmem [thread:$0]  %s175, 512, %s177, %s165, 256, 128, 8
        $region20: #{tpu_custom_call.1} parent=15 // pred_fallthru
          _
        // Predicated region
        $region21: #{tpu_custom_call.1} parent=15 // pred_check
          %p183 = pneg %p80
        $region22: #{tpu_custom_call.1} parent=15 // pred_check_branch
          %185 = sbr.rel (%p183) target = $region24
        $region23: #{tpu_custom_call.1} parent=15 // pred_region
          %s186 = sand.u32 %s18, 1
          %s187 = scalar_lea.sflag [#allocation6], %s186
          %s188 = sand.u32 %s70, 1
          %s189 = smul.addr %s188, 32
          %s190 = scalar_lea.vmem [#allocation5], %s189
          %s192 = ssub.s32 512, 512
          %193 = vsyncadd %s187, %s192
          %s194 = smul.addr %s25, 8
          %s195 = sadd.s32 %s26, %s194
          %s196 = smul.addr %s195, 128
          %s197 = scalar_lea.hbm %s1, %s196
          %s198 = sshll.u32 %s190, 4
          %s199 = int_to_ptr.vmem [resolvable:$true] %s198
          %204 = dma.hbm_to_vmem [thread:$0]  %s197, 512, %s199, %s187, 256, 128, 8
        $region24: #{tpu_custom_call.1} parent=15 // pred_fallthru
          _
        // Predicated region
        $region25: #{tpu_custom_call.1} parent=15 // pred_check
          %p205 = pneg %p108
        $region26: #{tpu_custom_call.1} parent=15 // pred_check_branch
          %207 = sbr.rel (%p205) target = $region28
        $region27: #{tpu_custom_call.1} parent=15 // pred_region
          %s208 = sand.u32 %s18, 1
          %s209 = scalar_lea.sflag [#allocation6], %s208
          %s210 = sand.u32 %s98, 1
          %s211 = smul.addr %s210, 8
          %s212 = scalar_lea.vmem [#allocation7], %s211
          %s214 = ssub.s32 128, 128
          %215 = vsyncadd %s209, %s214
          %s216 = smul.addr %s25, 2
          %s217 = sadd.s32 %s26, %s216
          %s218 = smul.addr %s217, 128
          %s219 = scalar_lea.hbm %s2, %s218
          %s221 = sshll.u32 %s212, 4
          %s222 = int_to_ptr.vmem [resolvable:$true] %s221
          %224 = dma.hbm_to_vmem [thread:$0]  %s219, 128, %s222, %s209
        $region28: #{tpu_custom_call.1} parent=15 // pred_fallthru
          _
      $region16: #{tpu_custom_call.1} parent=5 // pred_fallthru
        _
      %p225 = scmp.le.s32.totalorder 1, %s18
      %p226 = scmp.lt.s32.totalorder %s18, 5
      %p227 = pnand %p225, %p226
      %p228 = pneg %p227
      // Predicated region
      $region29: #{tpu_custom_call.1} parent=5 // pred_check
        _
      $region30: #{tpu_custom_call.1} parent=5 // pred_check_branch
        %230 = sbr.rel (%p227) target = $region32
      $region31: #{tpu_custom_call.1} parent=5 // pred_region
        %s231 = ssub.s32 %s18, 1
        %s232 = sand.u32 %s45, 1
        %s233 = scalar_lea.sflag [#allocation3], %s232
        %s234 = sand.u32 %s45, 1
        %s235 = smul.addr %s234, 32
        %s236 = scalar_lea.vmem [#allocation2], %s235
        // Predicated region
        $region33: #{tpu_custom_call.1} parent=31 // pred_check
          %p237 = pneg %p58
        $region34: #{tpu_custom_call.1} parent=31 // pred_check_branch
          %239 = sbr.rel (%p237) target = $region36
        $region35: #{tpu_custom_call.1} parent=31 // pred_region
          %240 = dma.done %s233, 512
        $region36: #{tpu_custom_call.1} parent=31 // pred_fallthru
          _
        %s241 = sand.u32 %s23, 1
        %s242 = scalar_lea.sflag [#allocation6], %s241
        %s243 = sand.u32 %s73, 1
        %s244 = smul.addr %s243, 32
        %s245 = scalar_lea.vmem [#allocation5], %s244
        // Predicated region
        $region37: #{tpu_custom_call.1} parent=31 // pred_check
          %p246 = pneg %p86
        $region38: #{tpu_custom_call.1} parent=31 // pred_check_branch
          %248 = sbr.rel (%p246) target = $region40
        $region39: #{tpu_custom_call.1} parent=31 // pred_region
          %249 = dma.done %s242, 512
        $region40: #{tpu_custom_call.1} parent=31 // pred_fallthru
          _
        %s250 = sand.u32 %s23, 1
        %s251 = scalar_lea.sflag [#allocation6], %s250
        %s252 = sand.u32 %s101, 1
        %s253 = smul.addr %s252, 8
        %s254 = scalar_lea.vmem [#allocation7], %s253
        // Predicated region
        $region41: #{tpu_custom_call.1} parent=31 // pred_check
          %p255 = pneg %p114
        $region42: #{tpu_custom_call.1} parent=31 // pred_check_branch
          %257 = sbr.rel (%p255) target = $region44
        $region43: #{tpu_custom_call.1} parent=31 // pred_region
          %258 = dma.done %s251, 128
        $region44: #{tpu_custom_call.1} parent=31 // pred_fallthru
          _
        %s259 = sand.u32 %s45, 1
        %s260 = scalar_lea.sflag [#allocation3], %s259
        %s261 = sand.u32 %s45, 1
        %s262 = smul.addr %s261, 32
        %s263 = scalar_lea.vmem [#allocation2], %s262
        %p264 = pneg %p58
        %p265 = pneg %p55
        %s266 = sand.u32 %s23, 1
        %s267 = scalar_lea.sflag [#allocation6], %s266
        %s268 = sand.u32 %s73, 1
        %s269 = smul.addr %s268, 32
        %s270 = scalar_lea.vmem [#allocation5], %s269
        %p271 = pneg %p86
        %p272 = pneg %p83
        %s273 = sand.u32 %s23, 1
        %s274 = scalar_lea.sflag [#allocation6], %s273
        %s275 = sand.u32 %s101, 1
        %s276 = smul.addr %s275, 8
        %s277 = scalar_lea.vmem [#allocation7], %s276
        %p278 = pneg %p114
        %p279 = pneg %p111
        %p280 = pneg %p142
        %p281 = pneg %p139
        %s282 = sand.u32 %s129, 1
        %s283 = scalar_lea.sflag [#allocation4], %s282
        %s284 = sand.u32 %s129, 1
        %s285 = smul.addr %s284, 8
        %s286 = scalar_lea.vmem [#allocation8], %s285
        %v287 = vld [vmem:[%s236] sm:$0xff]
        %v288 = vld [vmem:[%s245] sm:$0xff]
        %v289 = vsub.f32 %v287, %v288
        %v290 = vmul.f32 %v289, %v289
        %s291 = scalar_lea.vmem %s236, 8 [#allocation2]
        %v292 = vld [vmem:[%s291] sm:$0xff]
        %s293 = scalar_lea.vmem %s245, 8 [#allocation5]
        %v294 = vld [vmem:[%s293] sm:$0xff]
        %v295 = vsub.f32 %v292, %v294
        %v296 = vmul.f32 %v295, %v295
        %v297 = vadd.f32 %v290, %v296
        %s298 = scalar_lea.vmem %s236, 16 [#allocation2]
        %v299 = vld [vmem:[%s298] sm:$0xff]
        %s300 = scalar_lea.vmem %s245, 16 [#allocation5]
        %v301 = vld [vmem:[%s300] sm:$0xff]
        %v302 = vsub.f32 %v299, %v301
        %v303 = vmul.f32 %v302, %v302
        %v304 = vadd.f32 %v297, %v303
        %s305 = scalar_lea.vmem %s236, 24 [#allocation2]
        %v306 = vld [vmem:[%s305] sm:$0xff]
        %s307 = scalar_lea.vmem %s245, 24 [#allocation5]
        %v308 = vld [vmem:[%s307] sm:$0xff]
        %v309 = vsub.f32 %v306, %v308
        %v310 = vmul.f32 %v309, %v309
        %v311 = vadd.f32 %v304, %v310
        %v312 = vadd.f32 %v311, 1e-06
        %v313 = vrsqrt.pop %v312
        %v314 = vmul.f32 %v312, %v313
        %vm315 = vcmp.eq.f32.partialorder %v312, inf
        %v316 = vsel %vm315, %v312, %v314
        %vm317 = vcmp.eq.f32.partialorder %v312, 0.0
        %v318 = vand.u32 %v312, 2147483648
        %v319 = vsel %vm317, %v318, %v316
        %v320 = vld [vmem:[%s254] sm:$0xff]
        %v321 = vmul.f32 %v319, %v320
        %vm322 = vcmask 130048
        %323 = vst.msk [vmem:[%s286] sm:$0xff] %vm322, %v321
        %s324 = sand.u32 %s129, 1
        %s325 = scalar_lea.sflag [#allocation4], %s324
        %s326 = sand.u32 %s129, 1
        %s327 = smul.addr %s326, 8
        %s328 = scalar_lea.vmem [#allocation8], %s327
        // Predicated region
        $region45: #{tpu_custom_call.1} parent=31 // pred_check
          %p329 = pneg %p139
        $region46: #{tpu_custom_call.1} parent=31 // pred_check_branch
          %331 = sbr.rel (%p329) target = $region48
        $region47: #{tpu_custom_call.1} parent=31 // pred_region
          %s333 = ssub.s32 128, 128
          %334 = vsyncadd %s325, %s333
          %s335 = smul.addr %s27, 2
          %s336 = sadd.s32 %s28, %s335
          %s337 = smul.addr %s336, 128
          %s338 = scalar_lea.hbm %s3, %s337
          %s340 = sshll.u32 %s328, 4
          %s341 = int_to_ptr.vmem [resolvable:$true] %s340
          %343 = dma.vmem_to_hbm [thread:$0]  %s341, 128, %s338, %s325
        $region48: #{tpu_custom_call.1} parent=31 // pred_fallthru
          _
      $region32: #{tpu_custom_call.1} parent=5 // pred_fallthru
        _
      %p344 = scmp.le.s32.totalorder 2, %s18
      // Predicated region
      $region49: #{tpu_custom_call.1} parent=5 // pred_check
        %p345 = pneg %p344
      $region50: #{tpu_custom_call.1} parent=5 // pred_check_branch
        %347 = sbr.rel (%p345) target = $region52
      $region51: #{tpu_custom_call.1} parent=5 // pred_region
        %s348 = ssub.s32 %s18, 2
        // Predicated region
        $region53: #{tpu_custom_call.1} parent=51 // pred_check
          %p349 = pneg %p145
        $region54: #{tpu_custom_call.1} parent=51 // pred_check_branch
          %351 = sbr.rel (%p349) target = $region56
        $region55: #{tpu_custom_call.1} parent=51 // pred_region
          %s352 = sand.u32 %s130, 1
          %s353 = scalar_lea.sflag [#allocation4], %s352
          %s354 = sand.u32 %s130, 1
          %s355 = smul.addr %s354, 8
          %s356 = scalar_lea.vmem [#allocation8], %s355
          %357 = dma.done %s353, 128
        $region56: #{tpu_custom_call.1} parent=51 // pred_fallthru
          _
      $region52: #{tpu_custom_call.1} parent=5 // pred_fallthru
        _
    $region6: #{tpu_custom_call.1} parent=1 // loop_footer
      %s22 = sadd.s32 1, %s18
    $region7: #{tpu_custom_call.1} parent=1 // loop_footer_branch
      %17 = sbr.rel target = $region3
    $region8: #{tpu_custom_call.1} parent=1 // loop_exit
      _
    %358 = vsyncpa [#allocation3], 1
    %s359 = scalar_lea.sflag [#allocation3], 1
    %360 = vsyncpa %s359, 1
    %361 = vsyncpa [#allocation6], 1
    %s362 = scalar_lea.sflag [#allocation6], 1
    %363 = vsyncpa %s362, 1
    %364 = vsyncpa [#allocation4], 1
    %s365 = scalar_lea.sflag [#allocation4], 1
    %366 = vsyncpa %s365, 1

</llo_original>
